<compile_context>
chip_gen: v7x
topology: tpu7x:2x2x1
jax: 0.10.0
libtpu: 0.0.40
codegen_flags: <defaults>
</compile_context>

<pallas_src>
import jax
import jax.numpy as jnp
from jax.experimental import pallas as pl
from jax.experimental.pallas import tpu as pltpu

LANE = 128
_RESIDENT_RANK_MAX = 2048   # weights fully VMEM-resident up to this rank
_RANK_TILE = 512            # reduction tile for the large-rank fallback path


def _round_up(v, m):
    return (v + m - 1) // m * m


# -----------------------------------------------------------------------------
# Kernels
# -----------------------------------------------------------------------------
def _resident_kernel(x_ref, w_ref, b_ref, o_ref):
    """sigmoid(relu(x) @ w + b) with the whole weight block resident in VMEM."""
    x = jnp.maximum(x_ref[...], 0.0)                                   # F.relu
    y = jnp.dot(x, w_ref[...], preferred_element_type=jnp.float32) + b_ref[...]
    # Narrow store: only the real n_class columns go back to HBM.
    o_ref[...] = jax.nn.sigmoid(y[:, : o_ref.shape[-1]]).astype(o_ref.dtype)


def _rank_tiled_kernel(x_ref, w_ref, b_ref, o_ref, acc_ref):
    """Large-rank fallback: reduction over rank on grid axis 1 ("arbitrary")."""
    k = pl.program_id(1)

    @pl.when(k == 0)
    def _():
        acc_ref[...] = jnp.zeros_like(acc_ref)

    x = jnp.maximum(x_ref[...], 0.0)
    acc_ref[...] += jnp.dot(x, w_ref[...], preferred_element_type=jnp.float32)

    @pl.when(k == pl.num_programs(1) - 1)
    def _():
        y = acc_ref[...] + b_ref[...]
        o_ref[...] = jax.nn.sigmoid(y[:, : o_ref.shape[-1]]).astype(o_ref.dtype)


# -----------------------------------------------------------------------------
# Wrapper
# -----------------------------------------------------------------------------
def _pick_tile_n(n):
    if n <= 512:
        # One full-extent block (block dim == array dim is always legal): no
        # host-side batch padding and no grid overhead for small batches.
        return n
    # Big batches: 256/512-row tiles, capped so the batch grid has >= 2 steps
    # so "parallel" semantics can shard across both v7x TensorCores.
    return max(256, min(512, (n // 2) // 256 * 256))


@jax.jit
def classifier_forward(x, w, b):
    """Mirrors Classifier.forward: sigmoid(relu(x) @ w + b).

    x: (N, rank) f32
    w: (rank, n_class) f32   (transposed vs. PyTorch's (n_class, rank) layout)
    b: (n_class,) f32
    """
    x = x.astype(jnp.float32)
    N, R = x.shape
    n_class = w.shape[1]
    c_pad = _round_up(max(n_class, 1), LANE)   # lane-aligned weight/bias in VMEM

    tile_n = _pick_tile_n(N)
    n_pad = _round_up(N, tile_n)
    xp = x if n_pad == N else jnp.pad(x, ((0, n_pad - N), (0, 0)))

    # Bias lives lane-padded in VMEM (tiny, fetched once); output stays narrow.
    bp = jnp.zeros((1, c_pad), jnp.float32).at[0, :n_class].set(b.astype(jnp.float32))

    if R <= _RESIDENT_RANK_MAX:
        # ---- classifier-head path: weights fully resident, 1-D batch grid ----
        wp = jnp.zeros((R, c_pad), jnp.float32).at[:, :n_class].set(
            w.astype(jnp.float32))
        out = pl.pallas_call(
            _resident_kernel,
            out_shape=jax.ShapeDtypeStruct((n_pad, n_class), jnp.float32),
            grid_spec=pltpu.PrefetchScalarGridSpec(
                num_scalar_prefetch=0,
                grid=(n_pad // tile_n,),
                in_specs=[
                    # activations: new tile per batch step (rank not tiled/padded)
                    pl.BlockSpec((tile_n, R), lambda i: (i, 0)),
                    # weights: constant index -> DMA'd once, resident across batch
                    pl.BlockSpec((R, c_pad), lambda i: (0, 0)),
                    # bias: resident
                    pl.BlockSpec((1, c_pad), lambda i: (0, 0)),
                ],
                out_specs=pl.BlockSpec((tile_n, n_class), lambda i: (i, 0)),
            ),
            compiler_params=pltpu.CompilerParams(
                dimension_semantics=("parallel",)),
        )(xp, wp, bp)
    else:
        # ---- large-rank fallback: stream weights over a reduction grid axis ----
        tile_r = _RANK_TILE
        r_pad = _round_up(R, tile_r)
        xp = xp if r_pad == R else jnp.pad(xp, ((0, 0), (0, r_pad - R)))
        wp = jnp.zeros((r_pad, c_pad), jnp.float32).at[:R, :n_class].set(
            w.astype(jnp.float32))
        out = pl.pallas_call(
            _rank_tiled_kernel,
            out_shape=jax.ShapeDtypeStruct((n_pad, n_class), jnp.float32),
            grid_spec=pltpu.PrefetchScalarGridSpec(
                num_scalar_prefetch=0,
                grid=(n_pad // tile_n, r_pad // tile_r),
                in_specs=[
                    pl.BlockSpec((tile_n, tile_r), lambda i, k: (i, k)),
                    pl.BlockSpec((tile_r, c_pad), lambda i, k: (k, 0)),
                    pl.BlockSpec((1, c_pad), lambda i, k: (0, 0)),
                ],
                out_specs=pl.BlockSpec((tile_n, n_class), lambda i, k: (i, 0)),
                # Wide f32 accumulator kept in VMEM; only the narrow real
                # columns are written back at the final reduction step.
                scratch_shapes=[pltpu.VMEM((tile_n, c_pad), jnp.float32)],
            ),
            compiler_params=pltpu.CompilerParams(
                dimension_semantics=("parallel", "arbitrary")),
        )(xp, wp, bp)

    return out if n_pad == N else out[:N]


def classifier_reference(x, w, b):
    """Pure-JAX reference of Classifier.forward."""
    return jax.nn.sigmoid(jnp.maximum(x, 0.0) @ w + b[None, :])


if __name__ == "__main__":
    key = jax.random.PRNGKey(0)
    k_w, k_b, k_x = jax.random.split(key, 3)

    N, RANK, N_CLASS = 2, 32, 1
    # Synthetic Linear(rank, n_class) parameters, stored as (rank, n_class).
    w = jax.random.normal(k_w, (RANK, N_CLASS), jnp.float32) * 0.1
    b = jax.random.normal(k_b, (N_CLASS,), jnp.float32) * 0.1
    x = jax.random.normal(k_x, (N, RANK), jnp.float32)

    y = classifier_forward(x, w, b)
    jax.block_until_ready(y)
    assert y.shape == (N, N_CLASS), y.shape

    y_ref = classifier_reference(x, w, b)
    assert jnp.allclose(y, y_ref, rtol=1e-5, atol=1e-6), (y, y_ref)

    print("KERNEL_OK")
</pallas_src>

<mosaic_0001>
module attributes {stable_mosaic.version = 11 : i64} {
  func.func @_resident_kernel(%arg0: i32, %arg1: memref<2x32xf32, #tpu.memory_space<vmem>>, %arg2: memref<32x128xf32, #tpu.memory_space<vmem>>, %arg3: memref<1x128xf32, #tpu.memory_space<vmem>>, %arg4: memref<2x1xf32, #tpu.memory_space<vmem>>) attributes {dimension_semantics = [#tpu.dimension_semantics<parallel>], iteration_bounds = array<i64: 1>, scalar_prefetch = 0 : i64, scratch_operands = 0 : i64, tpu.core_type = #tpu.core_type<tc>, window_params = [{transform_indices = @transform_0, window_bounds = array<i64: 2, 32>}, {pipeline_mode = #tpu.pipeline_mode<synchronous>, transform_indices = @transform_1, window_bounds = array<i64: 32, 128>}, {pipeline_mode = #tpu.pipeline_mode<synchronous>, transform_indices = @transform_2, window_bounds = array<i64: 1, 128>}, {transform_indices = @transform_3, window_bounds = array<i64: 2, 1>}]} {
    %c0 = arith.constant 0 : index
    %c0_0 = arith.constant 0 : index
    %0 = vector.load %arg1[%c0, %c0_0] : memref<2x32xf32, #tpu.memory_space<vmem>>, vector<2x32xf32>
    %cst = arith.constant 0.000000e+00 : f32
    %1 = vector.broadcast %cst : f32 to vector<2x32xf32>
    %2 = arith.maximumf %0, %1 : vector<2x32xf32>
    %c0_1 = arith.constant 0 : index
    %c0_2 = arith.constant 0 : index
    %3 = vector.load %arg2[%c0_1, %c0_2] : memref<32x128xf32, #tpu.memory_space<vmem>>, vector<32x128xf32>
    %cst_3 = arith.constant dense<0.000000e+00> : vector<2x128xf32>
    %4 = tpu.matmul %2, %3, %cst_3 {dimension_numbers = #tpu.dot_dimension_numbers<[1], [0], [0], [1], [0, 0, 1, 1], [], []>} : vector<2x32xf32>, vector<32x128xf32>, vector<2x128xf32> -> vector<2x128xf32>
    %c0_4 = arith.constant 0 : index
    %c0_5 = arith.constant 0 : index
    %5 = vector.load %arg3[%c0_4, %c0_5] : memref<1x128xf32, #tpu.memory_space<vmem>>, vector<1x128xf32>
    %6 = vector.broadcast %5 : vector<1x128xf32> to vector<2x128xf32>
    %7 = arith.addf %4, %6 : vector<2x128xf32>
    %8 = vector.extract_strided_slice %7 {offsets = [0, 0], sizes = [2, 1], strides = [1, 1]} : vector<2x128xf32> to vector<2x1xf32>
    %9 = arith.negf %8 : vector<2x1xf32>
    %10 = math.exp %9 : vector<2x1xf32>
    %cst_6 = arith.constant 1.000000e+00 : f32
    %11 = vector.broadcast %cst_6 : f32 to vector<2x1xf32>
    %12 = arith.addf %11, %10 : vector<2x1xf32>
    %13 = arith.divf %11, %12 : vector<2x1xf32>
    %c0_7 = arith.constant 0 : index
    %c0_8 = arith.constant 0 : index
    %14 = vector.load %arg4[%c0_7, %c0_8] : memref<2x1xf32, #tpu.memory_space<vmem>>, vector<2x1xf32>
    tpu.vector_store %arg4[%c0_7, %c0_8], %13 {strides = array<i32>} : memref<2x1xf32, #tpu.memory_space<vmem>>, vector<2x1xf32>,
    return
  }
  func.func @transform_0(%arg0: i32) -> (i32, i32) {
    %c0_i32 = arith.constant 0 : i32
    %c0_i32_0 = arith.constant 0 : i32
    return %arg0, %c0_i32 : i32, i32
  }
  func.func @transform_1(%arg0: i32) -> (i32, i32) {
    %c0_i32 = arith.constant 0 : i32
    %c0_i32_0 = arith.constant 0 : i32
    %c0_i32_1 = arith.constant 0 : i32
    return %c0_i32, %c0_i32_0 : i32, i32
  }
  func.func @transform_2(%arg0: i32) -> (i32, i32) {
    %c0_i32 = arith.constant 0 : i32
    %c0_i32_0 = arith.constant 0 : i32
    %c0_i32_1 = arith.constant 0 : i32
    return %c0_i32, %c0_i32_0 : i32, i32
  }
  func.func @transform_3(%arg0: i32) -> (i32, i32) {
    %c0_i32 = arith.constant 0 : i32
    %c0_i32_0 = arith.constant 0 : i32
    return %arg0, %c0_i32 : i32, i32
  }
}

</mosaic_0001>

<llo_original>
// kernel: classifier_forward.1
$region0: #{classifier_forward.1}
  #allocation0 [shape = 'u32[]', space=smem, size = 0x4, offset = 0x4, fixed_abs, tag = 'smem constant byte address 0x4 - core index']
  #allocation1 [shape = 'u32[144,128]{1,0:T(1,128)}', space=vmem, size = 0x12000, scoped, tag = 'internal scratch']
  %s0 = inlined_call_operand.vmem [shape: f32[2,32], index: 0, kind: input, shape index: {}]
  %s1 = inlined_call_operand.vmem [shape: f32[32,128], index: 1, kind: input, shape index: {}]
  %s2 = inlined_call_operand.vmem [shape: f32[1,128], index: 2, kind: input, shape index: {}]
  %s3 = inlined_call_operand.vmem [shape: f32[2,1], index: 3, kind: output, shape index: {}]
  %s4 = sld [smem:[#allocation0]]
  $region22: #{classifier_forward.1} parent=0
    _
  %s6 = ssub.s32 1, %s4
  %s7 = scalar_select 0, %s6, %s4
  // Predicated region
  $region2: #{classifier_forward.1} parent=0 // pred_check
    _
  $region3: #{classifier_forward.1} parent=0 // pred_check_branch
    %9 = sbr.rel (0) target = $region5
  $region4: #{classifier_forward.1} parent=0 // pred_region
    _
  $region5: #{classifier_forward.1} parent=0 // pred_fallthru
    _
  // Predicated region
  $region6: #{classifier_forward.1} parent=0 // pred_check
    _
  $region7: #{classifier_forward.1} parent=0 // pred_check_branch
    %11 = sbr.rel (0) target = $region9
  $region8: #{classifier_forward.1} parent=0 // pred_region
    _
  $region9: #{classifier_forward.1} parent=0 // pred_fallthru
    _
  // Predicated region
  $region10: #{classifier_forward.1} parent=0 // pred_check
    _
  $region11: #{classifier_forward.1} parent=0 // pred_check_branch
    %13 = sbr.rel (0) target = $region13
  $region12: #{classifier_forward.1} parent=0 // pred_region
    _
  $region13: #{classifier_forward.1} parent=0 // pred_fallthru
    _
  %v14 = vld [vmem:[%s0] sm:$0x3]
  %v15 = vmax.f32 %v14, 0.0
  %v16 = vld [vmem:[%s1] sm:$0xff]
  %v17 = vld [vmem:[%s1 + $0x8] sm:$0xff]
  %v18 = vld [vmem:[%s1 + $0x10] sm:$0xff]
  %v19 = vld [vmem:[%s1 + $0x18] sm:$0xff]
  %v20 = vld [vmem:[%s2] sm:$0x1]
  %v22 = vlaneseq
  %v23 = vshrl.u32 %v22, 7
  %v24 = vsub.s32 0, %v23
  %v25 = vrot.slane %v20, %v24
  %vm27 = vcmask 261120
  %v29 = vsel %vm27, %v15, 0
  %31 = vmatprep.subr.mxu0 0.0
  %32 = vmatpush1.msra.mxu0 %v16
  %33 = vmatprep.subr.mxu0 0.0
  %34 = vmatpush1.msra.mxu0 %v17
  %35 = vmatprep.subr.mxu0 0.0
  %36 = vmatpush1.msra.mxu0 %v18
  %37 = vmatprep.subr.mxu0 0.0
  %38 = vmatpush1.msra.mxu0 %v19
  %39 = vmatprep.subr.mxu0 0.0
  %40 = vmatpush1.msra.mxu0 0.0
  %41 = vmatprep.subr.mxu0 0.0
  %42 = vmatpush1.msra.mxu0 0.0
  %43 = vmatprep.subr.mxu0 0.0
  %44 = vmatpush1.msra.mxu0 0.0
  %45 = vmatprep.subr.mxu0 0.0
  %46 = vmatpush1.msra.mxu0 0.0
  %47 = vmatprep.subr.mxu0 0.0
  %48 = vmatpush1.msra.mxu0 0.0
  %49 = vmatprep.subr.mxu0 0.0
  %50 = vmatpush1.msra.mxu0 0.0
  %51 = vmatprep.subr.mxu0 0.0
  %52 = vmatpush1.msra.mxu0 0.0
  %53 = vmatprep.subr.mxu0 0.0
  %54 = vmatpush1.msra.mxu0 0.0
  %55 = vmatprep.subr.mxu0 0.0
  %56 = vmatpush1.msra.mxu0 0.0
  %57 = vmatprep.subr.mxu0 0.0
  %58 = vmatpush1.msra.mxu0 0.0
  %59 = vmatprep.subr.mxu0 0.0
  %60 = vmatpush1.msra.mxu0 0.0
  %61 = vmatprep.subr.mxu0 0.0
  %62 = vmatpush1.msra.mxu0 0.0
  %63 = vmatprep.subr.mxu0 0.0
  %64 = vmatpush1.msra.mxu0 0.0
  %65 = vmatprep.subr.mxu0 0.0
  %66 = vmatpush1.msra.mxu0 0.0
  %67 = vmatprep.subr.mxu0 0.0
  %68 = vmatpush1.msra.mxu0 0.0
  %69 = vmatprep.subr.mxu0 0.0
  %70 = vmatpush1.msra.mxu0 0.0
  %71 = vmatprep.subr.mxu0 0.0
  %72 = vmatpush1.msra.mxu0 0.0
  %73 = vmatprep.subr.mxu0 0.0
  %74 = vmatpush1.msra.mxu0 0.0
  %75 = vmatprep.subr.mxu0 0.0
  %76 = vmatpush1.msra.mxu0 0.0
  %77 = vmatprep.subr.mxu0 0.0
  %78 = vmatpush1.msra.mxu0 0.0
  %79 = vmatprep.subr.mxu0 0.0
  %80 = vmatpush1.msra.mxu0 0.0
  %81 = vmatprep.subr.mxu0 0.0
  %82 = vmatpush1.msra.mxu0 0.0
  %83 = vmatprep.subr.mxu0 0.0
  %84 = vmatpush1.msra.mxu0 0.0
  %85 = vmatprep.subr.mxu0 0.0
  %86 = vmatpush1.msra.mxu0 0.0
  %87 = vmatprep.subr.mxu0 0.0
  %88 = vmatpush1.msra.mxu0 0.0
  %89 = vmatprep.subr.mxu0 0.0
  %90 = vmatpush1.msra.mxu0 0.0
  %91 = vmatprep.subr.mxu0 0.0
  %92 = vmatpush1.msra.mxu0 0.0
  %93 = vmatprep.subr.mxu0 0.0
  %94 = vmatpush1.msra.mxu0 0.0
  %95 = vmatprep.mubr.f32.mxu0 0.0
  %96 = vmatmul.mubr.f32.gmra.mrb[0].mxu0 %v29
  %v97 = vpop.f32.mrb[0].mxu0
  %v98 = vadd.f32 %v25, %v97
  %v99 = vpop.f32.mrb[0].mxu0
  %100 = vdwg.mxu0
  %v101 = vxor.u32 %v98, 2147483648
  %v102 = vmul.f32 %v101, 1.442695
  %v103 = vpow.pop %v102
  %v104 = vadd.f32 %v103, 1.0
  %v105 = vrcp.pop %v104
  %v106 = vmul.f32 1.0, %v105
  %vm107 = vcmask 1024
  %108 = vst.msk [vmem:[%s3] sm:$0x3] %vm107, %v106
  // Predicated region
  $region14: #{classifier_forward.1} parent=0 // pred_check
    _
  $region15: #{classifier_forward.1} parent=0 // pred_check_branch
    %110 = sbr.rel (0) target = $region17
  $region16: #{classifier_forward.1} parent=0 // pred_region
    _
  $region17: #{classifier_forward.1} parent=0 // pred_fallthru
    _
  // Predicated region
  $region18: #{classifier_forward.1} parent=0 // pred_check
    _
  $region19: #{classifier_forward.1} parent=0 // pred_check_branch
    %112 = sbr.rel (0) target = $region21
  $region20: #{classifier_forward.1} parent=0 // pred_region
    _
  $region21: #{classifier_forward.1} parent=0 // pred_fallthru
    _

</llo_original>
